<compile_context>
chip_gen: v5e
topology: v5e:2x2
jax: 0.10.0
libtpu: 0.0.40
codegen_flags: <defaults>
</compile_context>

<pallas_src>
import functools
import math

import jax
import jax.numpy as jnp
from jax.experimental import pallas as pl
from jax.experimental.pallas import tpu as pltpu


def _build_pe_table(d_model: int, max_len: int) -> jnp.ndarray:
    """Deterministic sinusoidal table, identical math to the PyTorch __init__."""
    position = jnp.arange(0, max_len, dtype=jnp.float32)[:, None]          # (max_len, 1)
    div_term = jnp.exp(
        jnp.arange(0, d_model, 2, dtype=jnp.float32) * (-math.log(10000.0) / d_model)
    )                                                                       # (d_model//2,)
    angles = position * div_term                                            # (max_len, d_model//2)
    pe = jnp.zeros((max_len, d_model), dtype=jnp.float32)
    pe = pe.at[:, 0::2].set(jnp.sin(angles))
    pe = pe.at[:, 1::2].set(jnp.cos(angles))
    return pe                                                               # (max_len, d_model)


def _pe_add_kernel(x_ref, pe_ref, o_ref, *, seq_tile, batch, pe_resident):
    # x_ref : (seq_tile, B*D) lane-dense tile of the flattened input
    # pe_ref: (S_pad, D) resident table  OR  (seq_tile, D) per-step slice
    # o_ref : (seq_tile, B*D)
    if pe_resident:
        row0 = pl.multiple_of(pl.program_id(0) * seq_tile, seq_tile)
        pe_rows = pe_ref[pl.ds(row0, seq_tile), :]                          # (seq_tile, D)
    else:
        pe_rows = pe_ref[...]                                               # (seq_tile, D)
    # Broadcast PE over the (flattened) batch axis: lane-concat B copies.
    pe_bcast = jnp.concatenate([pe_rows] * batch, axis=-1)                  # (seq_tile, B*D)
    o_ref[...] = x_ref[...] + pe_bcast


def _choose_seq_tile(s_len: int, row_bytes: int,
                     target_block_bytes: int = 2 << 20) -> int:
    """Rows per block: a multiple of 8, sized so each x block is ~2 MiB."""
    t = max(8, (target_block_bytes // max(row_bytes, 1)) // 8 * 8)
    s_pad8 = pl.cdiv(s_len, 8) * 8
    t = min(t, s_pad8)
    # Prefer >= 2 grid steps so v7x megacore can split the HBM traffic.
    if t == s_pad8 and s_pad8 >= 16:
        t = pl.cdiv(s_pad8 // 2, 8) * 8
    return t


def positional_encoding_forward(x: jnp.ndarray, pe_table: jnp.ndarray) -> jnp.ndarray:
    """x: (S, B, D).  Returns x + pe[:S] (dropout in eval mode == identity)."""
    S, B, D = x.shape
    itemsize = jnp.dtype(x.dtype).itemsize
    row_bytes = B * D * itemsize

    seq_tile = _choose_seq_tile(S, row_bytes)
    S_pad = pl.cdiv(S, seq_tile) * seq_tile

    # Lane-dense 2-D views (trailing dim = B*D, a "big" lane axis).
    x2 = x.reshape(S, B * D)
    pe_slice = pe_table[:S, :].astype(x.dtype)                              # (S, D)
    if S_pad != S:
        x2 = jnp.pad(x2, ((0, S_pad - S), (0, 0)))
        pe_slice = jnp.pad(pe_slice, ((0, S_pad - S), (0, 0)))

    # Keep the PE table fully resident in VMEM when it is small (it usually
    # is: S*D*itemsize); otherwise stream a (seq_tile, D) slice per step.
    pe_resident = (S_pad * D * itemsize) <= (8 << 20)
    if pe_resident:
        pe_spec = pl.BlockSpec((S_pad, D), lambda i: (0, 0))
    else:
        pe_spec = pl.BlockSpec((seq_tile, D), lambda i: (i, 0))

    kernel = functools.partial(
        _pe_add_kernel, seq_tile=seq_tile, batch=B, pe_resident=pe_resident
    )

    out2 = pl.pallas_call(
        kernel,
        out_shape=jax.ShapeDtypeStruct((S_pad, B * D), x.dtype),
        grid_spec=pltpu.PrefetchScalarGridSpec(
            num_scalar_prefetch=0,
            grid=(S_pad // seq_tile,),
            in_specs=[
                # seq_tile is a multiple of 8; trailing dim equals the full
                # array dim, so the (8,128) block constraint is satisfied.
                pl.BlockSpec((seq_tile, B * D), lambda i: (i, 0)),
                pe_spec,
            ],
            out_specs=pl.BlockSpec((seq_tile, B * D), lambda i: (i, 0)),
        ),
        compiler_params=pltpu.CompilerParams(
            dimension_semantics=("parallel",),
            # Headroom-safe on v7x (64 MiB physical); above the 16/32 MiB
            # default scoped limits on v5e/v6e so the ~2 MiB blocks +
            # resident PE always fit double-buffered.
            vmem_limit_bytes=48 * 1024 * 1024,
        ),
    )(x2, pe_slice)

    return out2[:S].reshape(S, B, D)


if __name__ == "__main__":
    # Small shapes consistent with the module: seq=8, batch=2, d_model=32.
    S, B, D = 8, 2, 32
    MAX_LEN = 64  # stands in for max_len=5000 at toy scale

    key = jax.random.PRNGKey(0)
    x = jax.random.normal(key, (S, B, D), dtype=jnp.float32)

    pe_table = _build_pe_table(d_model=D, max_len=MAX_LEN)

    out = positional_encoding_forward(x, pe_table)
    out = jax.block_until_ready(out)

    # Reference check in plain JAX (same math).
    ref = x + pe_table[:S, :][:, None, :]
    assert out.shape == (S, B, D)
    assert jnp.allclose(out, ref, atol=1e-6, rtol=1e-6), "mismatch vs reference"

    print("KERNEL_OK")
</pallas_src>

<mosaic_0001>
module attributes {stable_mosaic.version = 11 : i64} {
  func.func @_pe_add_kernel(%arg0: i32, %arg1: memref<8x64xf32, #tpu.memory_space<vmem>>, %arg2: memref<8x32xf32, #tpu.memory_space<vmem>>, %arg3: memref<8x64xf32, #tpu.memory_space<vmem>>) attributes {dimension_semantics = [#tpu.dimension_semantics<parallel>], iteration_bounds = array<i64: 1>, scalar_prefetch = 0 : i64, scratch_operands = 0 : i64, tpu.core_type = #tpu.core_type<tc>, window_params = [{transform_indices = @transform_0, window_bounds = array<i64: 8, 64>}, {pipeline_mode = #tpu.pipeline_mode<synchronous>, transform_indices = @transform_1, window_bounds = array<i64: 8, 32>}, {transform_indices = @transform_2, window_bounds = array<i64: 8, 64>}]} {
    %c8_i32 = arith.constant 8 : i32
    %0 = arith.muli %arg0, %c8_i32 : i32
    %1 = tpu.assume_multiple %0, 8 : i32
    %2 = arith.index_cast %1 : i32 to index
    %c0 = arith.constant 0 : index
    %3 = vector.load %arg2[%2, %c0] : memref<8x32xf32, #tpu.memory_space<vmem>>, vector<8x32xf32>
    %4 = tpu.concatenate %3, %3 in 1 : vector<8x32xf32>, vector<8x32xf32> -> vector<8x64xf32>
    %c0_0 = arith.constant 0 : index
    %c0_1 = arith.constant 0 : index
    %5 = vector.load %arg1[%c0_0, %c0_1] : memref<8x64xf32, #tpu.memory_space<vmem>>, vector<8x64xf32>
    %6 = arith.addf %5, %4 : vector<8x64xf32>
    %c0_2 = arith.constant 0 : index
    %c0_3 = arith.constant 0 : index
    %7 = vector.load %arg3[%c0_2, %c0_3] : memref<8x64xf32, #tpu.memory_space<vmem>>, vector<8x64xf32>
    tpu.vector_store %arg3[%c0_2, %c0_3], %6 {strides = array<i32>} : memref<8x64xf32, #tpu.memory_space<vmem>>, vector<8x64xf32>,
    return
  }
  func.func @transform_0(%arg0: i32) -> (i32, i32) {
    %c0_i32 = arith.constant 0 : i32
    %c0_i32_0 = arith.constant 0 : i32
    return %arg0, %c0_i32 : i32, i32
  }
  func.func @transform_1(%arg0: i32) -> (i32, i32) {
    %c0_i32 = arith.constant 0 : i32
    %c0_i32_0 = arith.constant 0 : i32
    %c0_i32_1 = arith.constant 0 : i32
    return %c0_i32, %c0_i32_0 : i32, i32
  }
  func.func @transform_2(%arg0: i32) -> (i32, i32) {
    %c0_i32 = arith.constant 0 : i32
    %c0_i32_0 = arith.constant 0 : i32
    return %arg0, %c0_i32 : i32, i32
  }
}

</mosaic_0001>

<llo_original>
// kernel: tpu_custom_call.1
$region0: #{tpu_custom_call.1}
  #allocation0 [shape = 'u32[]', space=smem, size = 0x4, offset = 0x4, fixed_abs, tag = 'smem constant byte address 0x4 - core index']
  #allocation1 [shape = 'u32[72,128]{1,0:T(1,128)}', space=vmem, size = 0x9000, scoped, tag = 'internal scratch']
  %s0 = inlined_call_operand.hbm [shape: f32[8,64], index: 0, kind: input, shape index: {}]
  %s1 = inlined_call_operand.hbm [shape: f32[8,32], index: 1, kind: input, shape index: {}]
  %s2 = inlined_call_operand.hbm [shape: f32[8,64], index: 2, kind: output, shape index: {}]
  %s3 = sld [smem:[#allocation0]]
  $region26: #{tpu_custom_call.1} parent=0
    _
  %s5 = ssub.s32 1, %s3
  %s6 = scalar_select 0, %s5, %s3
  $region1: #{tpu_custom_call.1} parent=0
    #allocation2 [shape = 'u8[4096]{0}', space=vmem, size = 0x1000, scoped, tag = 'input window, operand 0, single buffered']
    #allocation3 [shape = 's32[1]{0}', space=sflag, size = 0x4, scoped, tag = 'scoped memory for tpu_custom_call.1']
    #allocation4 [shape = 's32[1]{0}', space=sflag, size = 0x4, scoped, tag = 'scoped memory for tpu_custom_call.1']
    #allocation5 [shape = 'u8[4096]{0}', space=vmem, size = 0x1000, scoped, tag = 'input window, operand 1, single buffered']
    #allocation6 [shape = 's32[1]{0}', space=sflag, size = 0x4, scoped, tag = 'scoped memory for tpu_custom_call.1']
    #allocation7 [shape = 'u8[4096]{0}', space=vmem, size = 0x1000, scoped, tag = 'output window, operand 0, single buffered']
    %7 = vsyncpa [#allocation3], 0
    %8 = vsyncpa [#allocation6], 0
    %9 = vsyncpa [#allocation4], 0
    // Predicated region
    $region2: #{tpu_custom_call.1} parent=1 // pred_check
      _
    $region3: #{tpu_custom_call.1} parent=1 // pred_check_branch
      %11 = sbr.rel (0) target = $region5
    $region4: #{tpu_custom_call.1} parent=1 // pred_region
      %13 = vsyncadd [#allocation3], 0
      %s15 = sshll.u32 %s0, 4
      %s16 = int_to_ptr.hbm [resolvable:$true] %s15
      %s17 = sshll.u32 [#allocation2], 4
      %s18 = int_to_ptr.vmem [resolvable:$true] %s17
      %20 = dma.hbm_to_vmem [thread:$0]  %s16, 128, %s18, [#allocation3]
    $region5: #{tpu_custom_call.1} parent=1 // pred_fallthru
      _
    // Predicated region
    $region6: #{tpu_custom_call.1} parent=1 // pred_check
      _
    $region7: #{tpu_custom_call.1} parent=1 // pred_check_branch
      %22 = sbr.rel (0) target = $region9
    $region8: #{tpu_custom_call.1} parent=1 // pred_region
      %24 = vsyncadd [#allocation6], 0
      %s26 = sshll.u32 %s1, 4
      %s27 = int_to_ptr.hbm [resolvable:$true] %s26
      %s28 = sshll.u32 [#allocation5], 4
      %s29 = int_to_ptr.vmem [resolvable:$true] %s28
      %31 = dma.hbm_to_vmem [thread:$0]  %s27, 128, %s29, [#allocation6]
    $region9: #{tpu_custom_call.1} parent=1 // pred_fallthru
      _
    // Predicated region
    $region10: #{tpu_custom_call.1} parent=1 // pred_check
      _
    $region11: #{tpu_custom_call.1} parent=1 // pred_check_branch
      %33 = sbr.rel (0) target = $region13
    $region12: #{tpu_custom_call.1} parent=1 // pred_region
      %35 = dma.done [#allocation3], 128
    $region13: #{tpu_custom_call.1} parent=1 // pred_fallthru
      _
    // Predicated region
    $region14: #{tpu_custom_call.1} parent=1 // pred_check
      _
    $region15: #{tpu_custom_call.1} parent=1 // pred_check_branch
      %37 = sbr.rel (0) target = $region17
    $region16: #{tpu_custom_call.1} parent=1 // pred_region
      %39 = dma.done [#allocation6], 128
    $region17: #{tpu_custom_call.1} parent=1 // pred_fallthru
      _
    %s40 = smul.u32 0, 8
    %s41 = scalar_lea.vmem [#allocation5], %s40
    %v42 = vld [vmem:[%s41] sm:$0xff]
    %44 = vrot.lane.b32.xlu0 %v42, 32
    %v45 = vpop.permute.xlu0 %44
    %vm47 = vcmask 261120
    %v48 = vsel %vm47, %v42, %v45
    %v49 = vld [vmem:[#allocation2] sm:$0xff]
    %v50 = vadd.f32 %v49, %v48
    %vm51 = vcmask 523264
    %52 = vst.msk [vmem:[#allocation7] sm:$0xff] %vm51, %v50
    // Predicated region
    $region18: #{tpu_custom_call.1} parent=1 // pred_check
      _
    $region19: #{tpu_custom_call.1} parent=1 // pred_check_branch
      %54 = sbr.rel (0) target = $region21
    $region20: #{tpu_custom_call.1} parent=1 // pred_region
      %56 = vsyncadd [#allocation4], 0
      %s58 = sshll.u32 [#allocation7], 4
      %s59 = int_to_ptr.vmem [resolvable:$true] %s58
      %s60 = sshll.u32 %s2, 4
      %s61 = int_to_ptr.hbm [resolvable:$true] %s60
      %63 = dma.vmem_to_hbm [thread:$0]  %s59, 128, %s61, [#allocation4]
    $region21: #{tpu_custom_call.1} parent=1 // pred_fallthru
      _
    // Predicated region
    $region22: #{tpu_custom_call.1} parent=1 // pred_check
      _
    $region23: #{tpu_custom_call.1} parent=1 // pred_check_branch
      %65 = sbr.rel (0) target = $region25
    $region24: #{tpu_custom_call.1} parent=1 // pred_region
      %67 = dma.done [#allocation4], 128
    $region25: #{tpu_custom_call.1} parent=1 // pred_fallthru
      _
    %68 = vsyncpa [#allocation3], 1
    %69 = vsyncpa [#allocation6], 1
    %70 = vsyncpa [#allocation4], 1

</llo_original>
